<compile_context>
chip_gen: v6e
topology: v6e:2x2x1
jax: 0.10.0
libtpu: 0.0.40
codegen_flags: <defaults>
</compile_context>

<pallas_src>
import functools

import jax
import jax.numpy as jnp
from jax.experimental import pallas as pl
from jax.experimental.pallas import tpu as pltpu

HIDDEN = 128  # hidden width of each branch (fused trunk width = 2 * HIDDEN)


# ----------------------------- Pallas kernel --------------------------------

def closeness_kernel(u_ref,
                     w1_ref, b1_ref, w2_ref, b2_ref, w3_ref, b3_ref, w4_ref, b4_ref,
                     x_ref, *, p):
    u = u_ref[...]

    def lin(x, w_ref, b_ref):
        return jnp.dot(x, w_ref[...], preferred_element_type=jnp.float32) + b_ref[...]

    # Fused WNN || GradHNN trunk: 4 matmuls of width 2*HIDDEN instead of 8 of
    # width HIDDEN (layers 2-4 are block-diagonal, layer 1 shares the input u).
    h = jnp.maximum(lin(u, w1_ref, b1_ref), 0.0)
    h = jnp.maximum(lin(h, w2_ref, b2_ref), 0.0)
    h = jnp.maximum(lin(h, w3_ref, b3_ref), 0.0)
    out = lin(h, w4_ref, b4_ref)                     # (tb, p + d)

    w_arr = out[:, :p]                               # upper-tri entries of W(u)
    g = out[:, p:]                                   # gradH(u)

    # d == 4 closed-form solve of W(u)^T X = gradH(u).
    # W is antisymmetric with (row-major triu order) a=W01, b=W02, c=W03,
    # pp=W12, q=W13, r=W23.  With Pf = a*r - b*q + c*pp (Pfaffian, det = Pf^2),
    # (W^T)^{-1} = M / Pf where M is the antisymmetric "dual" below.
    a  = w_arr[:, 0:1]; b  = w_arr[:, 1:2]; c = w_arr[:, 2:3]
    pp = w_arr[:, 3:4]; q  = w_arr[:, 4:5]; r = w_arr[:, 5:6]
    g0 = g[:, 0:1]; g1 = g[:, 1:2]; g2 = g[:, 2:3]; g3 = g[:, 3:4]

    pf = a * r - b * q + c * pp
    inv_pf = 1.0 / pf
    x0 = ( r * g1 - q * g2 + pp * g3) * inv_pf
    x1 = (-r * g0 + c * g2 - b  * g3) * inv_pf
    x2 = ( q * g0 - c * g1 + a  * g3) * inv_pf
    x3 = (-pp * g0 + b * g1 - a  * g2) * inv_pf
    x_ref[...] = jnp.concatenate([x0, x1, x2, x3], axis=-1)


# ------------------------------ wrapper --------------------------------------

def closeness_enforcer_forward(u, packed, d):
    """u: (B, d) f32.  packed: 8 fused weight/bias arrays.  Returns X: (B, d)."""
    assert d == 4, "fused Pfaffian solve implemented for manifold_dim == 4"
    # TODO(synk): general even d needs a batched LU solve (no Pallas primitive);
    #             fall back to a wflat/gradH-emitting kernel + jnp.linalg.solve(-W, g).
    B = u.shape[0]
    p = d * (d - 1) // 2

    # Pad batch to a multiple of 8 (f32 sublane tile); replicate the last row so
    # padded rows stay numerically benign (their outputs are discarded).
    B_pad = ((B + 7) // 8) * 8
    if B_pad != B:
        u = jnp.concatenate([u, jnp.broadcast_to(u[-1:], (B_pad - B, d))], axis=0)
    tb = B_pad if B_pad <= 128 else 128
    if B_pad % tb:
        extra = tb - (B_pad % tb)
        u = jnp.concatenate([u, jnp.broadcast_to(u[-1:], (extra, d))], axis=0)
        B_pad += extra

    def full(shape):
        n = len(shape)
        return pl.BlockSpec(shape, lambda i, _n=n: (0,) * _n)

    x = pl.pallas_call(
        functools.partial(closeness_kernel, p=p),
        grid=(B_pad // tb,),
        in_specs=[pl.BlockSpec((tb, d), lambda i: (i, 0))]
                 + [full(a.shape) for a in packed],
        out_specs=pl.BlockSpec((tb, d), lambda i: (i, 0)),
        out_shape=jax.ShapeDtypeStruct((B_pad, d), jnp.float32),
        compiler_params=pltpu.CompilerParams(
            dimension_semantics=("parallel",)),
    )(u, *packed)
    return x[:B]


# --------------------------- parameter construction -------------------------

def init_linear(key, fan_in, fan_out):
    kw, kb = jax.random.split(key)
    bound = 1.0 / jnp.sqrt(jnp.float32(fan_in))
    w = jax.random.uniform(kw, (fan_in, fan_out), jnp.float32, -bound, bound)
    b = jax.random.uniform(kb, (1, fan_out), jnp.float32, -bound, bound)
    return w, b


def make_params(key, d, hidden=HIDDEN):
    p = d * (d - 1) // 2
    keys = jax.random.split(key, 8)
    # WNN branch
    w1, b1 = init_linear(keys[0], d, hidden)
    w2, b2 = init_linear(keys[1], hidden, hidden)
    w3, b3 = init_linear(keys[2], hidden, hidden)
    w4, b4 = init_linear(keys[3], hidden, p)
    # GradHNN branch
    g1, c1 = init_linear(keys[4], d, hidden)
    g2, c2 = init_linear(keys[5], hidden, hidden)
    g3, c3 = init_linear(keys[6], hidden, hidden)
    g4, c4 = init_linear(keys[7], hidden, d)
    return (w1, b1, w2, b2, w3, b3, w4, b4,
            g1, c1, g2, c2, g3, c3, g4, c4)


def pack_params(params):
    """Fuse the two branches: concat layer 1 (shared input), block-diag layers 2-4."""
    (w1, b1, w2, b2, w3, b3, w4, b4,
     g1, c1, g2, c2, g3, c3, g4, c4) = params

    def blockdiag(a_, b_):
        out = jnp.zeros((a_.shape[0] + b_.shape[0], a_.shape[1] + b_.shape[1]),
                        jnp.float32)
        out = out.at[:a_.shape[0], :a_.shape[1]].set(a_)
        out = out.at[a_.shape[0]:, a_.shape[1]:].set(b_)
        return out

    W1c = jnp.concatenate([w1, g1], axis=1)          # (d, 2H)
    B1c = jnp.concatenate([b1, c1], axis=1)
    W2c = blockdiag(w2, g2); B2c = jnp.concatenate([b2, c2], axis=1)
    W3c = blockdiag(w3, g3); B3c = jnp.concatenate([b3, c3], axis=1)
    W4c = blockdiag(w4, g4); B4c = jnp.concatenate([b4, c4], axis=1)  # (2H, p+d)
    return (W1c, B1c, W2c, B2c, W3c, B3c, W4c, B4c)


# --------------------------- pure-JAX reference ------------------------------

def reference_forward(u, params, d):
    (w1, b1, w2, b2, w3, b3, w4, b4,
     g1, c1, g2, c2, g3, c3, g4, c4) = params
    relu = lambda x: jnp.maximum(x, 0.0)
    h = relu(u @ w1 + b1); h = relu(h @ w2 + b2); h = relu(h @ w3 + b3)
    w_arr = h @ w4 + b4
    rows, cols = jnp.triu_indices(d, k=1)            # same row-major order as torch
    B = u.shape[0]
    W = jnp.zeros((B, d, d), jnp.float32)
    W = W.at[:, rows, cols].set(w_arr)
    W = W.at[:, cols, rows].set(-w_arr)
    g = relu(u @ g1 + c1); g = relu(g @ g2 + c2); g = relu(g @ g3 + c3)
    grad_h = g @ g4 + c4
    return jnp.linalg.solve(jnp.swapaxes(W, 1, 2), grad_h[..., None])[..., 0]


# ----------------------------------- main ------------------------------------

if __name__ == "__main__":
    manifold_dim = 4   # even, so the antisymmetric W(u) is generically invertible
    batch = 4

    key = jax.random.PRNGKey(0)
    k_u, k_p = jax.random.split(key)
    u = jax.random.normal(k_u, (batch, manifold_dim), jnp.float32)
    params = make_params(k_p, manifold_dim)
    packed = pack_params(params)

    X = closeness_enforcer_forward(u, packed, manifold_dim)
    X = jax.block_until_ready(X)

    X_ref = reference_forward(u, params, manifold_dim)
    assert X.shape == (batch, manifold_dim)
    assert jnp.allclose(X, X_ref, rtol=2e-2, atol=2e-2), "mismatch vs reference"

    print("KERNEL_OK")
</pallas_src>

<mosaic_0001>
module attributes {stable_mosaic.version = 11 : i64} {
  func.func @closeness_kernel(%arg0: i32, %arg1: memref<8x4xf32, #tpu.memory_space<vmem>>, %arg2: memref<4x256xf32, #tpu.memory_space<vmem>>, %arg3: memref<1x256xf32, #tpu.memory_space<vmem>>, %arg4: memref<256x256xf32, #tpu.memory_space<vmem>>, %arg5: memref<1x256xf32, #tpu.memory_space<vmem>>, %arg6: memref<256x256xf32, #tpu.memory_space<vmem>>, %arg7: memref<1x256xf32, #tpu.memory_space<vmem>>, %arg8: memref<256x10xf32, #tpu.memory_space<vmem>>, %arg9: memref<1x10xf32, #tpu.memory_space<vmem>>, %arg10: memref<8x4xf32, #tpu.memory_space<vmem>>) attributes {dimension_semantics = [#tpu.dimension_semantics<parallel>], iteration_bounds = array<i64: 1>, scalar_prefetch = 0 : i64, scratch_operands = 0 : i64, tpu.core_type = #tpu.core_type<tc>, window_params = [{transform_indices = @transform_0, window_bounds = array<i64: 8, 4>}, {pipeline_mode = #tpu.pipeline_mode<synchronous>, transform_indices = @transform_1, window_bounds = array<i64: 4, 256>}, {pipeline_mode = #tpu.pipeline_mode<synchronous>, transform_indices = @transform_2, window_bounds = array<i64: 1, 256>}, {pipeline_mode = #tpu.pipeline_mode<synchronous>, transform_indices = @transform_3, window_bounds = array<i64: 256, 256>}, {pipeline_mode = #tpu.pipeline_mode<synchronous>, transform_indices = @transform_4, window_bounds = array<i64: 1, 256>}, {pipeline_mode = #tpu.pipeline_mode<synchronous>, transform_indices = @transform_5, window_bounds = array<i64: 256, 256>}, {pipeline_mode = #tpu.pipeline_mode<synchronous>, transform_indices = @transform_6, window_bounds = array<i64: 1, 256>}, {pipeline_mode = #tpu.pipeline_mode<synchronous>, transform_indices = @transform_7, window_bounds = array<i64: 256, 10>}, {pipeline_mode = #tpu.pipeline_mode<synchronous>, transform_indices = @transform_8, window_bounds = array<i64: 1, 10>}, {transform_indices = @transform_9, window_bounds = array<i64: 8, 4>}]} {
    %c0 = arith.constant 0 : index
    %c0_0 = arith.constant 0 : index
    %0 = vector.load %arg1[%c0, %c0_0] : memref<8x4xf32, #tpu.memory_space<vmem>>, vector<8x4xf32>
    %c0_1 = arith.constant 0 : index
    %c0_2 = arith.constant 0 : index
    %1 = vector.load %arg2[%c0_1, %c0_2] : memref<4x256xf32, #tpu.memory_space<vmem>>, vector<4x256xf32>
    %cst = arith.constant dense<0.000000e+00> : vector<8x256xf32>
    %2 = tpu.matmul %0, %1, %cst {dimension_numbers = #tpu.dot_dimension_numbers<[1], [0], [0], [1], [0, 0, 1, 1], [], []>} : vector<8x4xf32>, vector<4x256xf32>, vector<8x256xf32> -> vector<8x256xf32>
    %c0_3 = arith.constant 0 : index
    %c0_4 = arith.constant 0 : index
    %3 = vector.load %arg3[%c0_3, %c0_4] : memref<1x256xf32, #tpu.memory_space<vmem>>, vector<1x256xf32>
    %4 = vector.broadcast %3 : vector<1x256xf32> to vector<8x256xf32>
    %5 = arith.addf %2, %4 : vector<8x256xf32>
    %cst_5 = arith.constant 0.000000e+00 : f32
    %6 = vector.broadcast %cst_5 : f32 to vector<8x256xf32>
    %7 = arith.maximumf %5, %6 : vector<8x256xf32>
    %c0_6 = arith.constant 0 : index
    %c0_7 = arith.constant 0 : index
    %8 = vector.load %arg4[%c0_6, %c0_7] : memref<256x256xf32, #tpu.memory_space<vmem>>, vector<256x256xf32>
    %cst_8 = arith.constant dense<0.000000e+00> : vector<8x256xf32>
    %9 = tpu.matmul %7, %8, %cst_8 {dimension_numbers = #tpu.dot_dimension_numbers<[1], [0], [0], [1], [0, 0, 1, 1], [], []>} : vector<8x256xf32>, vector<256x256xf32>, vector<8x256xf32> -> vector<8x256xf32>
    %c0_9 = arith.constant 0 : index
    %c0_10 = arith.constant 0 : index
    %10 = vector.load %arg5[%c0_9, %c0_10] : memref<1x256xf32, #tpu.memory_space<vmem>>, vector<1x256xf32>
    %11 = vector.broadcast %10 : vector<1x256xf32> to vector<8x256xf32>
    %12 = arith.addf %9, %11 : vector<8x256xf32>
    %cst_11 = arith.constant 0.000000e+00 : f32
    %13 = vector.broadcast %cst_11 : f32 to vector<8x256xf32>
    %14 = arith.maximumf %12, %13 : vector<8x256xf32>
    %c0_12 = arith.constant 0 : index
    %c0_13 = arith.constant 0 : index
    %15 = vector.load %arg6[%c0_12, %c0_13] : memref<256x256xf32, #tpu.memory_space<vmem>>, vector<256x256xf32>
    %cst_14 = arith.constant dense<0.000000e+00> : vector<8x256xf32>
    %16 = tpu.matmul %14, %15, %cst_14 {dimension_numbers = #tpu.dot_dimension_numbers<[1], [0], [0], [1], [0, 0, 1, 1], [], []>} : vector<8x256xf32>, vector<256x256xf32>, vector<8x256xf32> -> vector<8x256xf32>
    %c0_15 = arith.constant 0 : index
    %c0_16 = arith.constant 0 : index
    %17 = vector.load %arg7[%c0_15, %c0_16] : memref<1x256xf32, #tpu.memory_space<vmem>>, vector<1x256xf32>
    %18 = vector.broadcast %17 : vector<1x256xf32> to vector<8x256xf32>
    %19 = arith.addf %16, %18 : vector<8x256xf32>
    %cst_17 = arith.constant 0.000000e+00 : f32
    %20 = vector.broadcast %cst_17 : f32 to vector<8x256xf32>
    %21 = arith.maximumf %19, %20 : vector<8x256xf32>
    %c0_18 = arith.constant 0 : index
    %c0_19 = arith.constant 0 : index
    %22 = vector.load %arg8[%c0_18, %c0_19] : memref<256x10xf32, #tpu.memory_space<vmem>>, vector<256x10xf32>
    %cst_20 = arith.constant dense<0.000000e+00> : vector<8x10xf32>
    %23 = tpu.matmul %21, %22, %cst_20 {dimension_numbers = #tpu.dot_dimension_numbers<[1], [0], [0], [1], [0, 0, 1, 1], [], []>} : vector<8x256xf32>, vector<256x10xf32>, vector<8x10xf32> -> vector<8x10xf32>
    %c0_21 = arith.constant 0 : index
    %c0_22 = arith.constant 0 : index
    %24 = vector.load %arg9[%c0_21, %c0_22] : memref<1x10xf32, #tpu.memory_space<vmem>>, vector<1x10xf32>
    %25 = vector.broadcast %24 : vector<1x10xf32> to vector<8x10xf32>
    %26 = arith.addf %23, %25 : vector<8x10xf32>
    %27 = vector.extract_strided_slice %26 {offsets = [0, 0], sizes = [8, 6], strides = [1, 1]} : vector<8x10xf32> to vector<8x6xf32>
    %28 = vector.extract_strided_slice %26 {offsets = [0, 6], sizes = [8, 4], strides = [1, 1]} : vector<8x10xf32> to vector<8x4xf32>
    %29 = vector.extract_strided_slice %27 {offsets = [0, 0], sizes = [8, 1], strides = [1, 1]} : vector<8x6xf32> to vector<8x1xf32>
    %30 = vector.extract_strided_slice %27 {offsets = [0, 1], sizes = [8, 1], strides = [1, 1]} : vector<8x6xf32> to vector<8x1xf32>
    %31 = vector.extract_strided_slice %27 {offsets = [0, 2], sizes = [8, 1], strides = [1, 1]} : vector<8x6xf32> to vector<8x1xf32>
    %32 = vector.extract_strided_slice %27 {offsets = [0, 3], sizes = [8, 1], strides = [1, 1]} : vector<8x6xf32> to vector<8x1xf32>
    %33 = vector.extract_strided_slice %27 {offsets = [0, 4], sizes = [8, 1], strides = [1, 1]} : vector<8x6xf32> to vector<8x1xf32>
    %34 = vector.extract_strided_slice %27 {offsets = [0, 5], sizes = [8, 1], strides = [1, 1]} : vector<8x6xf32> to vector<8x1xf32>
    %35 = vector.extract_strided_slice %28 {offsets = [0, 0], sizes = [8, 1], strides = [1, 1]} : vector<8x4xf32> to vector<8x1xf32>
    %36 = vector.extract_strided_slice %28 {offsets = [0, 1], sizes = [8, 1], strides = [1, 1]} : vector<8x4xf32> to vector<8x1xf32>
    %37 = vector.extract_strided_slice %28 {offsets = [0, 2], sizes = [8, 1], strides = [1, 1]} : vector<8x4xf32> to vector<8x1xf32>
    %38 = vector.extract_strided_slice %28 {offsets = [0, 3], sizes = [8, 1], strides = [1, 1]} : vector<8x4xf32> to vector<8x1xf32>
    %39 = arith.mulf %29, %34 : vector<8x1xf32>
    %40 = arith.mulf %30, %33 : vector<8x1xf32>
    %41 = arith.subf %39, %40 : vector<8x1xf32>
    %42 = arith.mulf %31, %32 : vector<8x1xf32>
    %43 = arith.addf %41, %42 : vector<8x1xf32>
    %cst_23 = arith.constant 1.000000e+00 : f32
    %44 = vector.broadcast %cst_23 : f32 to vector<8x1xf32>
    %45 = arith.divf %44, %43 : vector<8x1xf32>
    %46 = arith.mulf %34, %36 : vector<8x1xf32>
    %47 = arith.mulf %33, %37 : vector<8x1xf32>
    %48 = arith.subf %46, %47 : vector<8x1xf32>
    %49 = arith.mulf %32, %38 : vector<8x1xf32>
    %50 = arith.addf %48, %49 : vector<8x1xf32>
    %51 = arith.mulf %50, %45 : vector<8x1xf32>
    %cst_24 = arith.constant 0.000000e+00 : f32
    %52 = vector.broadcast %cst_24 : f32 to vector<8x1xf32>
    %53 = arith.subf %52, %34 : vector<8x1xf32>
    %54 = arith.mulf %53, %35 : vector<8x1xf32>
    %55 = arith.mulf %31, %37 : vector<8x1xf32>
    %56 = arith.addf %54, %55 : vector<8x1xf32>
    %57 = arith.mulf %30, %38 : vector<8x1xf32>
    %58 = arith.subf %56, %57 : vector<8x1xf32>
    %59 = arith.mulf %58, %45 : vector<8x1xf32>
    %60 = arith.mulf %33, %35 : vector<8x1xf32>
    %61 = arith.mulf %31, %36 : vector<8x1xf32>
    %62 = arith.subf %60, %61 : vector<8x1xf32>
    %63 = arith.mulf %29, %38 : vector<8x1xf32>
    %64 = arith.addf %62, %63 : vector<8x1xf32>
    %65 = arith.mulf %64, %45 : vector<8x1xf32>
    %cst_25 = arith.constant 0.000000e+00 : f32
    %66 = vector.broadcast %cst_25 : f32 to vector<8x1xf32>
    %67 = arith.subf %66, %32 : vector<8x1xf32>
    %68 = arith.mulf %67, %35 : vector<8x1xf32>
    %69 = arith.mulf %30, %36 : vector<8x1xf32>
    %70 = arith.addf %68, %69 : vector<8x1xf32>
    %71 = arith.mulf %29, %37 : vector<8x1xf32>
    %72 = arith.subf %70, %71 : vector<8x1xf32>
    %73 = arith.mulf %72, %45 : vector<8x1xf32>
    %74 = tpu.concatenate %51, %59, %65, %73 in 1 : vector<8x1xf32>, vector<8x1xf32>, vector<8x1xf32>, vector<8x1xf32> -> vector<8x4xf32>
    %c0_26 = arith.constant 0 : index
    %c0_27 = arith.constant 0 : index
    %75 = vector.load %arg10[%c0_26, %c0_27] : memref<8x4xf32, #tpu.memory_space<vmem>>, vector<8x4xf32>
    tpu.vector_store %arg10[%c0_26, %c0_27], %74 {strides = array<i32>} : memref<8x4xf32, #tpu.memory_space<vmem>>, vector<8x4xf32>,
    return
  }
  func.func @transform_0(%arg0: i32) -> (i32, i32) {
    %c0_i32 = arith.constant 0 : i32
    %c0_i32_0 = arith.constant 0 : i32
    return %arg0, %c0_i32 : i32, i32
  }
  func.func @transform_1(%arg0: i32) -> (i32, i32) {
    %c0_i32 = arith.constant 0 : i32
    %c0_i32_0 = arith.constant 0 : i32
    %c0_i32_1 = arith.constant 0 : i32
    return %c0_i32, %c0_i32_0 : i32, i32
  }
  func.func @transform_2(%arg0: i32) -> (i32, i32) {
    %c0_i32 = arith.constant 0 : i32
    %c0_i32_0 = arith.constant 0 : i32
    %c0_i32_1 = arith.constant 0 : i32
    return %c0_i32, %c0_i32_0 : i32, i32
  }
  func.func @transform_3(%arg0: i32) -> (i32, i32) {
    %c0_i32 = arith.constant 0 : i32
    %c0_i32_0 = arith.constant 0 : i32
    %c0_i32_1 = arith.constant 0 : i32
    return %c0_i32, %c0_i32_0 : i32, i32
  }
  func.func @transform_4(%arg0: i32) -> (i32, i32) {
    %c0_i32 = arith.constant 0 : i32
    %c0_i32_0 = arith.constant 0 : i32
    %c0_i32_1 = arith.constant 0 : i32
    return %c0_i32, %c0_i32_0 : i32, i32
  }
  func.func @transform_5(%arg0: i32) -> (i32, i32) {
    %c0_i32 = arith.constant 0 : i32
    %c0_i32_0 = arith.constant 0 : i32
    %c0_i32_1 = arith.constant 0 : i32
    return %c0_i32, %c0_i32_0 : i32, i32
  }
  func.func @transform_6(%arg0: i32) -> (i32, i32) {
    %c0_i32 = arith.constant 0 : i32
    %c0_i32_0 = arith.constant 0 : i32
    %c0_i32_1 = arith.constant 0 : i32
    return %c0_i32, %c0_i32_0 : i32, i32
  }
  func.func @transform_7(%arg0: i32) -> (i32, i32) {
    %c0_i32 = arith.constant 0 : i32
    %c0_i32_0 = arith.constant 0 : i32
    %c0_i32_1 = arith.constant 0 : i32
    return %c0_i32, %c0_i32_0 : i32, i32
  }
  func.func @transform_8(%arg0: i32) -> (i32, i32) {
    %c0_i32 = arith.constant 0 : i32
    %c0_i32_0 = arith.constant 0 : i32
    %c0_i32_1 = arith.constant 0 : i32
    return %c0_i32, %c0_i32_0 : i32, i32
  }
  func.func @transform_9(%arg0: i32) -> (i32, i32) {
    %c0_i32 = arith.constant 0 : i32
    %c0_i32_0 = arith.constant 0 : i32
    return %arg0, %c0_i32 : i32, i32
  }
}

</mosaic_0001>

<llo_original>
// kernel: tpu_custom_call.1
$region0: #{tpu_custom_call.1}
  #allocation0 [shape = 'u32[]', space=smem, size = 0x4, offset = 0x4, fixed_abs, tag = 'smem constant byte address 0x4 - core index']
  #allocation1 [shape = 'u32[144,128]{1,0:T(1,128)}', space=vmem, size = 0x12000, scoped, tag = 'internal scratch']
  %s0 = inlined_call_operand.vmem [shape: f32[8,4], index: 0, kind: input, shape index: {}]
  %s1 = inlined_call_operand.vmem [shape: f32[4,256], index: 1, kind: input, shape index: {}]
  %s2 = inlined_call_operand.vmem [shape: f32[1,256], index: 2, kind: input, shape index: {}]
  %s3 = inlined_call_operand.hbm [shape: f32[256,256], index: 3, kind: input, shape index: {}]
  %s4 = inlined_call_operand.vmem [shape: f32[1,256], index: 4, kind: input, shape index: {}]
  %s5 = inlined_call_operand.hbm [shape: f32[256,256], index: 5, kind: input, shape index: {}]
  %s6 = inlined_call_operand.vmem [shape: f32[1,256], index: 6, kind: input, shape index: {}]
  %s7 = inlined_call_operand.vmem [shape: f32[256,10], index: 7, kind: input, shape index: {}]
  %s8 = inlined_call_operand.vmem [shape: f32[1,10], index: 8, kind: input, shape index: {}]
  %s9 = inlined_call_operand.vmem [shape: f32[8,4], index: 9, kind: output, shape index: {}]
  %s10 = sld [smem:[#allocation0]]
  $region54: #{tpu_custom_call.1} parent=0
    _
  %s12 = ssub.s32 1, %s10
  %s13 = scalar_select 0, %s12, %s10
  $region1: #{tpu_custom_call.1} parent=0
    #allocation2 [shape = 'u8[262144]{0}', space=vmem, size = 0x40000, scoped, tag = 'input window, operand 3, single buffered']
    #allocation3 [shape = 's32[1]{0}', space=sflag, size = 0x4, scoped, tag = 'scoped memory for tpu_custom_call.1']
    #allocation4 [shape = 'u8[262144]{0}', space=vmem, size = 0x40000, scoped, tag = 'input window, operand 5, single buffered']
    #allocation5 [shape = 's32[1]{0}', space=sflag, size = 0x4, scoped, tag = 'scoped memory for tpu_custom_call.1']
    %14 = vsyncpa [#allocation3], 0
    %15 = vsyncpa [#allocation5], 0
    // Predicated region
    $region2: #{tpu_custom_call.1} parent=1 // pred_check
      _
    $region3: #{tpu_custom_call.1} parent=1 // pred_check_branch
      %17 = sbr.rel (0) target = $region5
    $region4: #{tpu_custom_call.1} parent=1 // pred_region
      _
    $region5: #{tpu_custom_call.1} parent=1 // pred_fallthru
      _
    // Predicated region
    $region6: #{tpu_custom_call.1} parent=1 // pred_check
      _
    $region7: #{tpu_custom_call.1} parent=1 // pred_check_branch
      %19 = sbr.rel (0) target = $region9
    $region8: #{tpu_custom_call.1} parent=1 // pred_region
      _
    $region9: #{tpu_custom_call.1} parent=1 // pred_fallthru
      _
    // Predicated region
    $region10: #{tpu_custom_call.1} parent=1 // pred_check
      _
    $region11: #{tpu_custom_call.1} parent=1 // pred_check_branch
      %21 = sbr.rel (0) target = $region13
    $region12: #{tpu_custom_call.1} parent=1 // pred_region
      _
    $region13: #{tpu_custom_call.1} parent=1 // pred_fallthru
      _
    // Predicated region
    $region14: #{tpu_custom_call.1} parent=1 // pred_check
      _
    $region15: #{tpu_custom_call.1} parent=1 // pred_check_branch
      %23 = sbr.rel (0) target = $region17
    $region16: #{tpu_custom_call.1} parent=1 // pred_region
      %s25 = ssub.s32 8192, 8192
      %26 = vsyncadd [#allocation3], %s25
      %s27 = sshll.u32 [#allocation2], 4
      %s28 = int_to_ptr.vmem [resolvable:$true] %s27
      %33 = dma.hbm_to_vmem [thread:$0]  %s3, 8192, %s28, [#allocation3], 256, 256, 16
    $region17: #{tpu_custom_call.1} parent=1 // pred_fallthru
      _
    // Predicated region
    $region18: #{tpu_custom_call.1} parent=1 // pred_check
      _
    $region19: #{tpu_custom_call.1} parent=1 // pred_check_branch
      %35 = sbr.rel (0) target = $region21
    $region20: #{tpu_custom_call.1} parent=1 // pred_region
      _
    $region21: #{tpu_custom_call.1} parent=1 // pred_fallthru
      _
    // Predicated region
    $region22: #{tpu_custom_call.1} parent=1 // pred_check
      _
    $region23: #{tpu_custom_call.1} parent=1 // pred_check_branch
      %37 = sbr.rel (0) target = $region25
    $region24: #{tpu_custom_call.1} parent=1 // pred_region
      %s39 = ssub.s32 8192, 8192
      %40 = vsyncadd [#allocation5], %s39
      %s41 = sshll.u32 [#allocation4], 4
      %s42 = int_to_ptr.vmem [resolvable:$true] %s41
      %47 = dma.hbm_to_vmem [thread:$0]  %s5, 8192, %s42, [#allocation5], 256, 256, 16
    $region25: #{tpu_custom_call.1} parent=1 // pred_fallthru
      _
    // Predicated region
    $region26: #{tpu_custom_call.1} parent=1 // pred_check
      _
    $region27: #{tpu_custom_call.1} parent=1 // pred_check_branch
      %49 = sbr.rel (0) target = $region29
    $region28: #{tpu_custom_call.1} parent=1 // pred_region
      _
    $region29: #{tpu_custom_call.1} parent=1 // pred_fallthru
      _
    // Predicated region
    $region30: #{tpu_custom_call.1} parent=1 // pred_check
      _
    $region31: #{tpu_custom_call.1} parent=1 // pred_check_branch
      %51 = sbr.rel (0) target = $region33
    $region32: #{tpu_custom_call.1} parent=1 // pred_region
      _
    $region33: #{tpu_custom_call.1} parent=1 // pred_fallthru
      _
    // Predicated region
    $region34: #{tpu_custom_call.1} parent=1 // pred_check
      _
    $region35: #{tpu_custom_call.1} parent=1 // pred_check_branch
      %53 = sbr.rel (0) target = $region37
    $region36: #{tpu_custom_call.1} parent=1 // pred_region
      _
    $region37: #{tpu_custom_call.1} parent=1 // pred_fallthru
      _
    // Predicated region
    $region38: #{tpu_custom_call.1} parent=1 // pred_check
      _
    $region39: #{tpu_custom_call.1} parent=1 // pred_check_branch
      %55 = sbr.rel (0) target = $region41
    $region40: #{tpu_custom_call.1} parent=1 // pred_region
      %56 = dma.done [#allocation3], 8192
    $region41: #{tpu_custom_call.1} parent=1 // pred_fallthru
      _
    // Predicated region
    $region42: #{tpu_custom_call.1} parent=1 // pred_check
      _
    $region43: #{tpu_custom_call.1} parent=1 // pred_check_branch
      %58 = sbr.rel (0) target = $region45
    $region44: #{tpu_custom_call.1} parent=1 // pred_region
      %59 = dma.done [#allocation5], 8192
    $region45: #{tpu_custom_call.1} parent=1 // pred_fallthru
      _
    %v60 = vld [vmem:[%s0] sm:$0xff]
    %v61 = vld [vmem:[%s1] sm:$0xff]
    %v62 = vld [vmem:[%s2] sm:$0x3]
    %v64 = vlaneseq
    %v65 = vshrl.u32 %v64, 7
    %v66 = vsub.s32 0, %v65
    %v67 = vrot.slane %v62, %v66
    %v68 = vlaneseq
    %v69 = vshrl.u32 %v68, 7
    %v70 = vsub.s32 1, %v69
    %v71 = vrot.slane %v62, %v70
    %v75 = vcombine.high %v61, %v61
    %vm76 = vcmask 31744
    %v78 = vsel %vm76, %v60, 0
    %vm80 = vcmask 1043456
    %v81 = vsel %vm80, %v61, 0
    %v83 = vsel %vm80, %v75, 0
    %85 = vmatprep.subr.mxu0 0.0
    %86 = vmatpush1.msra.mxu0 0.0
    %87 = vmatprep.subr.mxu0 0.0
    %88 = vmatpush1.msra.mxu0 0.0
    %89 = vmatprep.subr.mxu0 0.0
    %90 = vmatpush1.msra.mxu0 0.0
    %91 = vmatprep.subr.mxu0 0.0
    %92 = vmatpush1.msra.mxu0 0.0
    %93 = vmatprep.subr.mxu0 0.0
    %94 = vmatpush1.msra.mxu0 0.0
    %95 = vmatprep.subr.mxu0 0.0
    %96 = vmatpush1.msra.mxu0 0.0
    %97 = vmatprep.subr.mxu0 0.0
    %98 = vmatpush1.msra.mxu0 0.0
    %99 = vmatprep.subr.mxu0 0.0
    %100 = vmatpush1.msra.mxu0 0.0
    %101 = vmatprep.subr.mxu0 0.0
    %102 = vmatpush1.msra.mxu0 0.0
    %103 = vmatprep.subr.mxu0 0.0
    %104 = vmatpush1.msra.mxu0 0.0
    %105 = vmatprep.subr.mxu0 0.0
    %106 = vmatpush1.msra.mxu0 0.0
    %107 = vmatprep.subr.mxu0 0.0
    %108 = vmatpush1.msra.mxu0 0.0
    %109 = vmatprep.subr.mxu0 0.0
    %110 = vmatpush1.msra.mxu0 0.0
    %111 = vmatprep.subr.mxu0 0.0
    %112 = vmatpush1.msra.mxu0 0.0
    %113 = vmatprep.subr.mxu0 0.0
    %114 = vmatpush1.msra.mxu0 0.0
    %115 = vmatprep.subr.mxu0 %v83
    %116 = vmatpush1.msra.mxu0 %v81
    %117 = vmatprep.subr.mxu0 0.0
    %118 = vmatpush2.msra.mxu0 0.0
    %119 = vmatprep.subr.mxu0 0.0
    %120 = vmatpush2.msra.mxu0 0.0
    %121 = vmatprep.subr.mxu0 0.0
    %122 = vmatpush2.msra.mxu0 0.0
    %123 = vmatprep.subr.mxu0 0.0
    %124 = vmatpush2.msra.mxu0 0.0
    %125 = vmatprep.subr.mxu0 0.0
    %126 = vmatpush2.msra.mxu0 0.0
    %127 = vmatprep.subr.mxu0 0.0
    %128 = vmatpush2.msra.mxu0 0.0
    %129 = vmatprep.subr.mxu0 0.0
    %130 = vmatpush2.msra.mxu0 0.0
    %131 = vmatprep.subr.mxu0 0.0
    %132 = vmatpush2.msra.mxu0 0.0
    %133 = vmatprep.subr.mxu0 0.0
    %134 = vmatpush2.msra.mxu0 0.0
    %135 = vmatprep.subr.mxu0 0.0
    %136 = vmatpush2.msra.mxu0 0.0
    %137 = vmatprep.subr.mxu0 0.0
    %138 = vmatpush2.msra.mxu0 0.0
    %139 = vmatprep.subr.mxu0 0.0
    %140 = vmatpush2.msra.mxu0 0.0
    %141 = vmatprep.subr.mxu0 0.0
    %142 = vmatpush2.msra.mxu0 0.0
    %143 = vmatprep.subr.mxu0 0.0
    %144 = vmatpush2.msra.mxu0 0.0
    %145 = vmatprep.subr.mxu0 0.0
    %146 = vmatpush2.msra.mxu0 0.0
    %147 = vmatprep.subr.mxu0 0.0
    %148 = vmatpush2.msra.mxu0 0.0
    %149 = vmatprep.mubr.f32.mxu0 0.0
    %150 = vmatmul.mubr.f32.gmra.mxu0 %v78
    %v151 = vpop.f32.mrf.mxu0
    %v152 = vadd.f32 %v67, %v151
    %v153 = vpop.f32.mrf.mxu0
    %v154 = vadd.f32 %v71, %v153
    %155 = vdwg.mxu0
    %v156 = vmax.f32 %v152, 0.0
    %v157 = vmax.f32 %v154, 0.0
    %v158 = vld [vmem:[#allocation2] sm:$0xff]
    %v159 = vld [vmem:[#allocation2 + $0x8] sm:$0xff]
    %v160 = vld [vmem:[#allocation2 + $0x10] sm:$0xff]
    %v161 = vld [vmem:[#allocation2 + $0x18] sm:$0xff]
    %v162 = vld [vmem:[#allocation2 + $0x20] sm:$0xff]
    %v163 = vld [vmem:[#allocation2 + $0x28] sm:$0xff]
    %v164 = vld [vmem:[#allocation2 + $0x30] sm:$0xff]
    %v165 = vld [vmem:[#allocation2 + $0x38] sm:$0xff]
    %v166 = vld [vmem:[#allocation2 + $0x40] sm:$0xff]
    %v167 = vld [vmem:[#allocation2 + $0x48] sm:$0xff]
    %v168 = vld [vmem:[#allocation2 + $0x50] sm:$0xff]
    %v169 = vld [vmem:[#allocation2 + $0x58] sm:$0xff]
    %v170 = vld [vmem:[#allocation2 + $0x60] sm:$0xff]
    %v171 = vld [vmem:[#allocation2 + $0x68] sm:$0xff]
    %v172 = vld [vmem:[#allocation2 + $0x70] sm:$0xff]
    %v173 = vld [vmem:[#allocation2 + $0x78] sm:$0xff]
    %v174 = vld [vmem:[#allocation2 + $0x80] sm:$0xff]
    %v175 = vld [vmem:[#allocation2 + $0x88] sm:$0xff]
    %v176 = vld [vmem:[#allocation2 + $0x90] sm:$0xff]
    %v177 = vld [vmem:[#allocation2 + $0x98] sm:$0xff]
    %v178 = vld [vmem:[#allocation2 + $0xa0] sm:$0xff]
    %v179 = vld [vmem:[#allocation2 + $0xa8] sm:$0xff]
    %v180 = vld [vmem:[#allocation2 + $0xb0] sm:$0xff]
    %v181 = vld [vmem:[#allocation2 + $0xb8] sm:$0xff]
    %v182 = vld [vmem:[#allocation2 + $0xc0] sm:$0xff]
    %v183 = vld [vmem:[#allocation2 + $0xc8] sm:$0xff]
    %v184 = vld [vmem:[#allocation2 + $0xd0] sm:$0xff]
    %v185 = vld [vmem:[#allocation2 + $0xd8] sm:$0xff]
    %v186 = vld [vmem:[#allocation2 + $0xe0] sm:$0xff]
    %v187 = vld [vmem:[#allocation2 + $0xe8] sm:$0xff]
    %v188 = vld [vmem:[#allocation2 + $0xf0] sm:$0xff]
    %v189 = vld [vmem:[#allocation2 + $0xf8] sm:$0xff]
    %v190 = vld [vmem:[#allocation2 + $0x100] sm:$0xff]
    %v191 = vld [vmem:[#allocation2 + $0x108] sm:$0xff]
    %v192 = vld [vmem:[#allocation2 + $0x110] sm:$0xff]
    %v193 = vld [vmem:[#allocation2 + $0x118] sm:$0xff]
    %v194 = vld [vmem:[#allocation2 + $0x120] sm:$0xff]
    %v195 = vld [vmem:[#allocation2 + $0x128] sm:$0xff]
    %v196 = vld [vmem:[#allocation2 + $0x130] sm:$0xff]
    %v197 = vld [vmem:[#allocation2 + $0x138] sm:$0xff]
    %v198 = vld [vmem:[#allocation2 + $0x140] sm:$0xff]
    %v199 = vld [vmem:[#allocation2 + $0x148] sm:$0xff]
    %v200 = vld [vmem:[#allocation2 + $0x150] sm:$0xff]
    %v201 = vld [vmem:[#allocation2 + $0x158] sm:$0xff]
    %v202 = vld [vmem:[#allocation2 + $0x160] sm:$0xff]
    %v203 = vld [vmem:[#allocation2 + $0x168] sm:$0xff]
    %v204 = vld [vmem:[#allocation2 + $0x170] sm:$0xff]
    %v205 = vld [vmem:[#allocation2 + $0x178] sm:$0xff]
    %v206 = vld [vmem:[#allocation2 + $0x180] sm:$0xff]
    %v207 = vld [vmem:[#allocation2 + $0x188] sm:$0xff]
    %v208 = vld [vmem:[#allocation2 + $0x190] sm:$0xff]
    %v209 = vld [vmem:[#allocation2 + $0x198] sm:$0xff]
    %v210 = vld [vmem:[#allocation2 + $0x1a0] sm:$0xff]
    %v211 = vld [vmem:[#allocation2 + $0x1a8] sm:$0xff]
    %v212 = vld [vmem:[#allocation2 + $0x1b0] sm:$0xff]
    %v213 = vld [vmem:[#allocation2 + $0x1b8] sm:$0xff]
    %v214 = vld [vmem:[#allocation2 + $0x1c0] sm:$0xff]
    %v215 = vld [vmem:[#allocation2 + $0x1c8] sm:$0xff]
    %v216 = vld [vmem:[#allocation2 + $0x1d0] sm:$0xff]
    %v217 = vld [vmem:[#allocation2 + $0x1d8] sm:$0xff]
    %v218 = vld [vmem:[#allocation2 + $0x1e0] sm:$0xff]
    %v219 = vld [vmem:[#allocation2 + $0x1e8] sm:$0xff]
    %v220 = vld [vmem:[#allocation2 + $0x1f0] sm:$0xff]
    %v221 = vld [vmem:[#allocation2 + $0x1f8] sm:$0xff]
    %v222 = vld [vmem:[%s4] sm:$0x3]
    %v224 = vlaneseq
    %v225 = vshrl.u32 %v224, 7
    %v226 = vsub.s32 0, %v225
    %v227 = vrot.slane %v222, %v226
    %v228 = vlaneseq
    %v229 = vshrl.u32 %v228, 7
    %v230 = vsub.s32 1, %v229
    %v231 = vrot.slane %v222, %v230
    %234 = vmatprep.subr.mxu0 %v189
    %235 = vmatpush1.msra.mxu0 %v188
    %236 = vmatprep.subr.mxu0 %v187
    %237 = vmatpush1.msra.mxu0 %v186
    %238 = vmatprep.subr.mxu0 %v185
    %239 = vmatpush1.msra.mxu0 %v184
    %240 = vmatprep.subr.mxu0 %v183
    %241 = vmatpush1.msra.mxu0 %v182
    %242 = vmatprep.subr.mxu0 %v181
    %243 = vmatpush1.msra.mxu0 %v180
    %244 = vmatprep.subr.mxu0 %v179
    %245 = vmatpush1.msra.mxu0 %v178
    %246 = vmatprep.subr.mxu0 %v177
    %247 = vmatpush1.msra.mxu0 %v176
    %248 = vmatprep.subr.mxu0 %v175
    %249 = vmatpush1.msra.mxu0 %v174
    %250 = vmatprep.subr.mxu0 %v173
    %251 = vmatpush1.msra.mxu0 %v172
    %252 = vmatprep.subr.mxu0 %v171
    %253 = vmatpush1.msra.mxu0 %v170
    %254 = vmatprep.subr.mxu0 %v169
    %255 = vmatpush1.msra.mxu0 %v168
    %256 = vmatprep.subr.mxu0 %v167
    %257 = vmatpush1.msra.mxu0 %v166
    %258 = vmatprep.subr.mxu0 %v165
    %259 = vmatpush1.msra.mxu0 %v164
    %260 = vmatprep.subr.mxu0 %v163
    %261 = vmatpush1.msra.mxu0 %v162
    %262 = vmatprep.subr.mxu0 %v161
    %263 = vmatpush1.msra.mxu0 %v160
    %264 = vmatprep.subr.mxu0 %v159
    %265 = vmatpush1.msra.mxu0 %v158
    %266 = vmatprep.subr.mxu0 %v221
    %267 = vmatpush2.msra.mxu0 %v220
    %268 = vmatprep.subr.mxu0 %v219
    %269 = vmatpush2.msra.mxu0 %v218
    %270 = vmatprep.subr.mxu0 %v217
    %271 = vmatpush2.msra.mxu0 %v216
    %272 = vmatprep.subr.mxu0 %v215
    %273 = vmatpush2.msra.mxu0 %v214
    %274 = vmatprep.subr.mxu0 %v213
    %275 = vmatpush2.msra.mxu0 %v212
    %276 = vmatprep.subr.mxu0 %v211
    %277 = vmatpush2.msra.mxu0 %v210
    %278 = vmatprep.subr.mxu0 %v209
    %279 = vmatpush2.msra.mxu0 %v208
    %280 = vmatprep.subr.mxu0 %v207
    %281 = vmatpush2.msra.mxu0 %v206
    %282 = vmatprep.subr.mxu0 %v205
    %283 = vmatpush2.msra.mxu0 %v204
    %284 = vmatprep.subr.mxu0 %v203
    %285 = vmatpush2.msra.mxu0 %v202
    %286 = vmatprep.subr.mxu0 %v201
    %287 = vmatpush2.msra.mxu0 %v200
    %288 = vmatprep.subr.mxu0 %v199
    %289 = vmatpush2.msra.mxu0 %v198
    %290 = vmatprep.subr.mxu0 %v197
    %291 = vmatpush2.msra.mxu0 %v196
    %292 = vmatprep.subr.mxu0 %v195
    %293 = vmatpush2.msra.mxu0 %v194
    %294 = vmatprep.subr.mxu0 %v193
    %295 = vmatpush2.msra.mxu0 %v192
    %296 = vmatprep.subr.mxu0 %v191
    %297 = vmatpush2.msra.mxu0 %v190
    %298 = vmatprep.mubr.f32.mxu0 %v157
    %299 = vmatmul.mubr.f32.gmra.mxu0 %v156
    %v300 = vpop.f32.mrf.mxu0
    %v301 = vadd.f32 %v227, %v300
    %v302 = vpop.f32.mrf.mxu0
    %v303 = vadd.f32 %v231, %v302
    %304 = vdwg.mxu0
    %v305 = vmax.f32 %v301, 0.0
    %v306 = vmax.f32 %v303, 0.0
    %v307 = vld [vmem:[#allocation4] sm:$0xff]
    %v308 = vld [vmem:[#allocation4 + $0x8] sm:$0xff]
    %v309 = vld [vmem:[#allocation4 + $0x10] sm:$0xff]
    %v310 = vld [vmem:[#allocation4 + $0x18] sm:$0xff]
    %v311 = vld [vmem:[#allocation4 + $0x20] sm:$0xff]
    %v312 = vld [vmem:[#allocation4 + $0x28] sm:$0xff]
    %v313 = vld [vmem:[#allocation4 + $0x30] sm:$0xff]
    %v314 = vld [vmem:[#allocation4 + $0x38] sm:$0xff]
    %v315 = vld [vmem:[#allocation4 + $0x40] sm:$0xff]
    %v316 = vld [vmem:[#allocation4 + $0x48] sm:$0xff]
    %v317 = vld [vmem:[#allocation4 + $0x50] sm:$0xff]
    %v318 = vld [vmem:[#allocation4 + $0x58] sm:$0xff]
    %v319 = vld [vmem:[#allocation4 + $0x60] sm:$0xff]
    %v320 = vld [vmem:[#allocation4 + $0x68] sm:$0xff]
    %v321 = vld [vmem:[#allocation4 + $0x70] sm:$0xff]
    %v322 = vld [vmem:[#allocation4 + $0x78] sm:$0xff]
    %v323 = vld [vmem:[#allocation4 + $0x80] sm:$0xff]
    %v324 = vld [vmem:[#allocation4 + $0x88] sm:$0xff]
    %v325 = vld [vmem:[#allocation4 + $0x90] sm:$0xff]
    %v326 = vld [vmem:[#allocation4 + $0x98] sm:$0xff]
    %v327 = vld [vmem:[#allocation4 + $0xa0] sm:$0xff]
    %v328 = vld [vmem:[#allocation4 + $0xa8] sm:$0xff]
    %v329 = vld [vmem:[#allocation4 + $0xb0] sm:$0xff]
    %v330 = vld [vmem:[#allocation4 + $0xb8] sm:$0xff]
    %v331 = vld [vmem:[#allocation4 + $0xc0] sm:$0xff]
    %v332 = vld [vmem:[#allocation4 + $0xc8] sm:$0xff]
    %v333 = vld [vmem:[#allocation4 + $0xd0] sm:$0xff]
    %v334 = vld [vmem:[#allocation4 + $0xd8] sm:$0xff]
    %v335 = vld [vmem:[#allocation4 + $0xe0] sm:$0xff]
    %v336 = vld [vmem:[#allocation4 + $0xe8] sm:$0xff]
    %v337 = vld [vmem:[#allocation4 + $0xf0] sm:$0xff]
    %v338 = vld [vmem:[#allocation4 + $0xf8] sm:$0xff]
    %v339 = vld [vmem:[#allocation4 + $0x100] sm:$0xff]
    %v340 = vld [vmem:[#allocation4 + $0x108] sm:$0xff]
    %v341 = vld [vmem:[#allocation4 + $0x110] sm:$0xff]
    %v342 = vld [vmem:[#allocation4 + $0x118] sm:$0xff]
    %v343 = vld [vmem:[#allocation4 + $0x120] sm:$0xff]
    %v344 = vld [vmem:[#allocation4 + $0x128] sm:$0xff]
    %v345 = vld [vmem:[#allocation4 + $0x130] sm:$0xff]
    %v346 = vld [vmem:[#allocation4 + $0x138] sm:$0xff]
    %v347 = vld [vmem:[#allocation4 + $0x140] sm:$0xff]
    %v348 = vld [vmem:[#allocation4 + $0x148] sm:$0xff]
    %v349 = vld [vmem:[#allocation4 + $0x150] sm:$0xff]
    %v350 = vld [vmem:[#allocation4 + $0x158] sm:$0xff]
    %v351 = vld [vmem:[#allocation4 + $0x160] sm:$0xff]
    %v352 = vld [vmem:[#allocation4 + $0x168] sm:$0xff]
    %v353 = vld [vmem:[#allocation4 + $0x170] sm:$0xff]
    %v354 = vld [vmem:[#allocation4 + $0x178] sm:$0xff]
    %v355 = vld [vmem:[#allocation4 + $0x180] sm:$0xff]
    %v356 = vld [vmem:[#allocation4 + $0x188] sm:$0xff]
    %v357 = vld [vmem:[#allocation4 + $0x190] sm:$0xff]
    %v358 = vld [vmem:[#allocation4 + $0x198] sm:$0xff]
    %v359 = vld [vmem:[#allocation4 + $0x1a0] sm:$0xff]
    %v360 = vld [vmem:[#allocation4 + $0x1a8] sm:$0xff]
    %v361 = vld [vmem:[#allocation4 + $0x1b0] sm:$0xff]
    %v362 = vld [vmem:[#allocation4 + $0x1b8] sm:$0xff]
    %v363 = vld [vmem:[#allocation4 + $0x1c0] sm:$0xff]
    %v364 = vld [vmem:[#allocation4 + $0x1c8] sm:$0xff]
    %v365 = vld [vmem:[#allocation4 + $0x1d0] sm:$0xff]
    %v366 = vld [vmem:[#allocation4 + $0x1d8] sm:$0xff]
    %v367 = vld [vmem:[#allocation4 + $0x1e0] sm:$0xff]
    %v368 = vld [vmem:[#allocation4 + $0x1e8] sm:$0xff]
    %v369 = vld [vmem:[#allocation4 + $0x1f0] sm:$0xff]
    %v370 = vld [vmem:[#allocation4 + $0x1f8] sm:$0xff]
    %v371 = vld [vmem:[%s6] sm:$0x3]
    %v373 = vlaneseq
    %v374 = vshrl.u32 %v373, 7
    %v375 = vsub.s32 0, %v374
    %v376 = vrot.slane %v371, %v375
    %v377 = vlaneseq
    %v378 = vshrl.u32 %v377, 7
    %v379 = vsub.s32 1, %v378
    %v380 = vrot.slane %v371, %v379
    %383 = vmatprep.subr.mxu0 %v338
    %384 = vmatpush1.msra.mxu0 %v337
    %385 = vmatprep.subr.mxu0 %v336
    %386 = vmatpush1.msra.mxu0 %v335
    %387 = vmatprep.subr.mxu0 %v334
    %388 = vmatpush1.msra.mxu0 %v333
    %389 = vmatprep.subr.mxu0 %v332
    %390 = vmatpush1.msra.mxu0 %v331
    %391 = vmatprep.subr.mxu0 %v330
    %392 = vmatpush1.msra.mxu0 %v329
    %393 = vmatprep.subr.mxu0 %v328
    %394 = vmatpush1.msra.mxu0 %v327
    %395 = vmatprep.subr.mxu0 %v326
    %396 = vmatpush1.msra.mxu0 %v325
    %397 = vmatprep.subr.mxu0 %v324
    %398 = vmatpush1.msra.mxu0 %v323
    %399 = vmatprep.subr.mxu0 %v322
    %400 = vmatpush1.msra.mxu0 %v321
    %401 = vmatprep.subr.mxu0 %v320
    %402 = vmatpush1.msra.mxu0 %v319
    %403 = vmatprep.subr.mxu0 %v318
    %404 = vmatpush1.msra.mxu0 %v317
    %405 = vmatprep.subr.mxu0 %v316
    %406 = vmatpush1.msra.mxu0 %v315
    %407 = vmatprep.subr.mxu0 %v314
    %408 = vmatpush1.msra.mxu0 %v313
    %409 = vmatprep.subr.mxu0 %v312
    %410 = vmatpush1.msra.mxu0 %v311
    %411 = vmatprep.subr.mxu0 %v310
    %412 = vmatpush1.msra.mxu0 %v309
    %413 = vmatprep.subr.mxu0 %v308
    %414 = vmatpush1.msra.mxu0 %v307
    %415 = vmatprep.subr.mxu0 %v370
    %416 = vmatpush2.msra.mxu0 %v369
    %417 = vmatprep.subr.mxu0 %v368
    %418 = vmatpush2.msra.mxu0 %v367
    %419 = vmatprep.subr.mxu0 %v366
    %420 = vmatpush2.msra.mxu0 %v365
    %421 = vmatprep.subr.mxu0 %v364
    %422 = vmatpush2.msra.mxu0 %v363
    %423 = vmatprep.subr.mxu0 %v362
    %424 = vmatpush2.msra.mxu0 %v361
    %425 = vmatprep.subr.mxu0 %v360
    %426 = vmatpush2.msra.mxu0 %v359
    %427 = vmatprep.subr.mxu0 %v358
    %428 = vmatpush2.msra.mxu0 %v357
    %429 = vmatprep.subr.mxu0 %v356
    %430 = vmatpush2.msra.mxu0 %v355
    %431 = vmatprep.subr.mxu0 %v354
    %432 = vmatpush2.msra.mxu0 %v353
    %433 = vmatprep.subr.mxu0 %v352
    %434 = vmatpush2.msra.mxu0 %v351
    %435 = vmatprep.subr.mxu0 %v350
    %436 = vmatpush2.msra.mxu0 %v349
    %437 = vmatprep.subr.mxu0 %v348
    %438 = vmatpush2.msra.mxu0 %v347
    %439 = vmatprep.subr.mxu0 %v346
    %440 = vmatpush2.msra.mxu0 %v345
    %441 = vmatprep.subr.mxu0 %v344
    %442 = vmatpush2.msra.mxu0 %v343
    %443 = vmatprep.subr.mxu0 %v342
    %444 = vmatpush2.msra.mxu0 %v341
    %445 = vmatprep.subr.mxu0 %v340
    %446 = vmatpush2.msra.mxu0 %v339
    %447 = vmatprep.mubr.f32.mxu0 %v306
    %448 = vmatmul.mubr.f32.gmra.mxu0 %v305
    %v449 = vpop.f32.mrf.mxu0
    %v450 = vadd.f32 %v376, %v449
    %v451 = vpop.f32.mrf.mxu0
    %v452 = vadd.f32 %v380, %v451
    %453 = vdwg.mxu0
    %v454 = vmax.f32 %v450, 0.0
    %v455 = vmax.f32 %v452, 0.0
    %v456 = vld [vmem:[%s7] sm:$0xff]
    %v457 = vld [vmem:[%s7 + $0x8] sm:$0xff]
    %v458 = vld [vmem:[%s7 + $0x10] sm:$0xff]
    %v459 = vld [vmem:[%s7 + $0x18] sm:$0xff]
    %v460 = vld [vmem:[%s7 + $0x20] sm:$0xff]
    %v461 = vld [vmem:[%s7 + $0x28] sm:$0xff]
    %v462 = vld [vmem:[%s7 + $0x30] sm:$0xff]
    %v463 = vld [vmem:[%s7 + $0x38] sm:$0xff]
    %v464 = vld [vmem:[%s7 + $0x40] sm:$0xff]
    %v465 = vld [vmem:[%s7 + $0x48] sm:$0xff]
    %v466 = vld [vmem:[%s7 + $0x50] sm:$0xff]
    %v467 = vld [vmem:[%s7 + $0x58] sm:$0xff]
    %v468 = vld [vmem:[%s7 + $0x60] sm:$0xff]
    %v469 = vld [vmem:[%s7 + $0x68] sm:$0xff]
    %v470 = vld [vmem:[%s7 + $0x70] sm:$0xff]
    %v471 = vld [vmem:[%s7 + $0x78] sm:$0xff]
    %v472 = vld [vmem:[%s7 + $0x80] sm:$0xff]
    %v473 = vld [vmem:[%s7 + $0x88] sm:$0xff]
    %v474 = vld [vmem:[%s7 + $0x90] sm:$0xff]
    %v475 = vld [vmem:[%s7 + $0x98] sm:$0xff]
    %v476 = vld [vmem:[%s7 + $0xa0] sm:$0xff]
    %v477 = vld [vmem:[%s7 + $0xa8] sm:$0xff]
    %v478 = vld [vmem:[%s7 + $0xb0] sm:$0xff]
    %v479 = vld [vmem:[%s7 + $0xb8] sm:$0xff]
    %v480 = vld [vmem:[%s7 + $0xc0] sm:$0xff]
    %v481 = vld [vmem:[%s7 + $0xc8] sm:$0xff]
    %v482 = vld [vmem:[%s7 + $0xd0] sm:$0xff]
    %v483 = vld [vmem:[%s7 + $0xd8] sm:$0xff]
    %v484 = vld [vmem:[%s7 + $0xe0] sm:$0xff]
    %v485 = vld [vmem:[%s7 + $0xe8] sm:$0xff]
    %v486 = vld [vmem:[%s7 + $0xf0] sm:$0xff]
    %v487 = vld [vmem:[%s7 + $0xf8] sm:$0xff]
    %v488 = vld [vmem:[%s8] sm:$0x1]
    %v490 = vlaneseq
    %v491 = vshrl.u32 %v490, 7
    %v492 = vsub.s32 0, %v491
    %v493 = vrot.slane %v488, %v492
    %495 = vmatprep.subr.mxu0 0.0
    %496 = vmatpush1.msra.mxu0 %v471
    %497 = vmatprep.subr.mxu0 0.0
    %498 = vmatpush1.msra.mxu0 %v470
    %499 = vmatprep.subr.mxu0 0.0
    %500 = vmatpush1.msra.mxu0 %v469
    %501 = vmatprep.subr.mxu0 0.0
    %502 = vmatpush1.msra.mxu0 %v468
    %503 = vmatprep.subr.mxu0 0.0
    %504 = vmatpush1.msra.mxu0 %v467
    %505 = vmatprep.subr.mxu0 0.0
    %506 = vmatpush1.msra.mxu0 %v466
    %507 = vmatprep.subr.mxu0 0.0
    %508 = vmatpush1.msra.mxu0 %v465
    %509 = vmatprep.subr.mxu0 0.0
    %510 = vmatpush1.msra.mxu0 %v464
    %511 = vmatprep.subr.mxu0 0.0
    %512 = vmatpush1.msra.mxu0 %v463
    %513 = vmatprep.subr.mxu0 0.0
    %514 = vmatpush1.msra.mxu0 %v462
    %515 = vmatprep.subr.mxu0 0.0
    %516 = vmatpush1.msra.mxu0 %v461
    %517 = vmatprep.subr.mxu0 0.0
    %518 = vmatpush1.msra.mxu0 %v460
    %519 = vmatprep.subr.mxu0 0.0
    %520 = vmatpush1.msra.mxu0 %v459
    %521 = vmatprep.subr.mxu0 0.0
    %522 = vmatpush1.msra.mxu0 %v458
    %523 = vmatprep.subr.mxu0 0.0
    %524 = vmatpush1.msra.mxu0 %v457
    %525 = vmatprep.subr.mxu0 0.0
    %526 = vmatpush1.msra.mxu0 %v456
    %527 = vmatprep.subr.mxu0 0.0
    %528 = vmatpush2.msra.mxu0 %v487
    %529 = vmatprep.subr.mxu0 0.0
    %530 = vmatpush2.msra.mxu0 %v486
    %531 = vmatprep.subr.mxu0 0.0
    %532 = vmatpush2.msra.mxu0 %v485
    %533 = vmatprep.subr.mxu0 0.0
    %534 = vmatpush2.msra.mxu0 %v484
    %535 = vmatprep.subr.mxu0 0.0
    %536 = vmatpush2.msra.mxu0 %v483
    %537 = vmatprep.subr.mxu0 0.0
    %538 = vmatpush2.msra.mxu0 %v482
    %539 = vmatprep.subr.mxu0 0.0
    %540 = vmatpush2.msra.mxu0 %v481
    %541 = vmatprep.subr.mxu0 0.0
    %542 = vmatpush2.msra.mxu0 %v480
    %543 = vmatprep.subr.mxu0 0.0
    %544 = vmatpush2.msra.mxu0 %v479
    %545 = vmatprep.subr.mxu0 0.0
    %546 = vmatpush2.msra.mxu0 %v478
    %547 = vmatprep.subr.mxu0 0.0
    %548 = vmatpush2.msra.mxu0 %v477
    %549 = vmatprep.subr.mxu0 0.0
    %550 = vmatpush2.msra.mxu0 %v476
    %551 = vmatprep.subr.mxu0 0.0
    %552 = vmatpush2.msra.mxu0 %v475
    %553 = vmatprep.subr.mxu0 0.0
    %554 = vmatpush2.msra.mxu0 %v474
    %555 = vmatprep.subr.mxu0 0.0
    %556 = vmatpush2.msra.mxu0 %v473
    %557 = vmatprep.subr.mxu0 0.0
    %558 = vmatpush2.msra.mxu0 %v472
    %559 = vmatprep.mubr.f32.mxu0 %v455
    %560 = vmatmul.mubr.f32.gmra.mxu0 %v454
    %v561 = vpop.f32.mrf.mxu0
    %v562 = vadd.f32 %v493, %v561
    %v563 = vpop.f32.mrf.mxu0
    %564 = vdwg.mxu0
    %566 = vrot.lane.b32.xlu0 %v562, 123
    %v567 = vpop.permute.xlu0 %566
    %v569 = vmul.f32 %v562, %v567
    %570 = vrot.lane.b32.xlu0 %v562, 125
    %v571 = vpop.permute.xlu0 %570
    %v573 = vmul.f32 %v562, %v571
    %575 = vrot.lane.b32.xlu0 %v573, 127
    %v576 = vpop.permute.xlu0 %575
    %v578 = vsub.f32 %v569, %v576
    %579 = vrot.lane.b32.xlu0 %v562, 127
    %v580 = vpop.permute.xlu0 %579
    %v582 = vmul.f32 %v562, %v580
    %584 = vrot.lane.b32.xlu0 %v582, 126
    %v585 = vpop.permute.xlu0 %584
    %v587 = vadd.f32 %v578, %v585
    %v588 = vrcp.pop %v587
    %v589 = vmul.f32 1.0, %v588
    %590 = vrot.lane.b32.xlu0 %v562, 126
    %v591 = vpop.permute.xlu0 %590
    %v593 = vmul.f32 %v562, %v591
    %594 = vrot.lane.b32.xlu0 %v562, 124
    %v595 = vpop.permute.xlu0 %594
    %v597 = vmul.f32 %v562, %v595
    %599 = vrot.lane.b32.xlu0 %v597, 1
    %v600 = vpop.permute.xlu0 %599
    %v602 = vsub.f32 %v593, %v600
    %603 = vrot.lane.b32.xlu0 %v562, 122
    %v604 = vpop.permute.xlu0 %603
    %v606 = vmul.f32 %v562, %v604
    %608 = vrot.lane.b32.xlu0 %v606, 2
    %v609 = vpop.permute.xlu0 %608
    %v611 = vadd.f32 %v602, %v609
    %613 = vrot.lane.b32.xlu0 %v589, 5
    %v614 = vpop.permute.xlu0 %613
    %v616 = vmul.f32 %v611, %v614
    %v617 = vsub.f32 0.0, %v562
    %v618 = vmul.f32 %v617, %v580
    %619 = vrot.lane.b32.xlu0 %v606, 3
    %v620 = vpop.permute.xlu0 %619
    %v622 = vadd.f32 %v618, %v620
    %623 = vrot.lane.b32.xlu0 %v562, 120
    %v624 = vpop.permute.xlu0 %623
    %v626 = vmul.f32 %v562, %v624
    %628 = vrot.lane.b32.xlu0 %v626, 4
    %v629 = vpop.permute.xlu0 %628
    %v631 = vsub.f32 %v622, %v629
    %v632 = vmul.f32 %v631, %v614
    %634 = vrot.lane.b32.xlu0 %v569, 2
    %v635 = vpop.permute.xlu0 %634
    %v637 = vsub.f32 %v593, %v635
    %638 = vrot.lane.b32.xlu0 %v562, 119
    %v639 = vpop.permute.xlu0 %638
    %v641 = vmul.f32 %v562, %v639
    %643 = vrot.lane.b32.xlu0 %v641, 4
    %v644 = vpop.permute.xlu0 %643
    %v646 = vadd.f32 %v637, %v644
    %647 = vrot.lane.b32.xlu0 %v589, 4
    %v648 = vpop.permute.xlu0 %647
    %v650 = vmul.f32 %v646, %v648
    %v651 = vmul.f32 %v617, %v571
    %v652 = vadd.f32 %v651, %v609
    %653 = vrot.lane.b32.xlu0 %v626, 3
    %v654 = vpop.permute.xlu0 %653
    %v656 = vsub.f32 %v652, %v654
    %657 = vrot.lane.b32.xlu0 %v589, 3
    %v658 = vpop.permute.xlu0 %657
    %v660 = vmul.f32 %v656, %v658
    %662 = vrot.lane.b32.xlu0 %v616, 123
    %v663 = vpop.permute.xlu0 %662
    %666 = vrot.lane.b32.xlu0 %v632, 124
    %v667 = vpop.permute.xlu0 %666
    %670 = vrot.lane.b32.xlu0 %v650, 126
    %v671 = vpop.permute.xlu0 %670
    %vm673 = vcmask 7168
    %v674 = vsel %vm673, %v663, %v667
    %vm675 = vcmask 15360
    %v676 = vsel %vm675, %v674, %v671
    %vm677 = vcmask 23552
    %v678 = vsel %vm677, %v676, %v660
    %679 = vst.msk [vmem:[%s9] sm:$0xff] %vm76, %v678
    // Predicated region
    $region46: #{tpu_custom_call.1} parent=1 // pred_check
      _
    $region47: #{tpu_custom_call.1} parent=1 // pred_check_branch
      %681 = sbr.rel (0) target = $region49
    $region48: #{tpu_custom_call.1} parent=1 // pred_region
      _
    $region49: #{tpu_custom_call.1} parent=1 // pred_fallthru
      _
    // Predicated region
    $region50: #{tpu_custom_call.1} parent=1 // pred_check
      _
    $region51: #{tpu_custom_call.1} parent=1 // pred_check_branch
      %683 = sbr.rel (0) target = $region53
    $region52: #{tpu_custom_call.1} parent=1 // pred_region
      _
    $region53: #{tpu_custom_call.1} parent=1 // pred_fallthru
      _
    %684 = vsyncpa [#allocation3], 1
    %685 = vsyncpa [#allocation5], 1

</llo_original>
